<compile_context>
chip_gen: v7x
topology: tpu7x:2x2x1
jax: 0.10.0
libtpu: 0.0.40
codegen_flags: <defaults>
</compile_context>

<pallas_src>
import functools
import inspect

import jax
import jax.numpy as jnp
from jax.experimental import pallas as pl
from jax.experimental.pallas import tpu as pltpu

LN_EPS = 1e-5        # PyTorch nn.LayerNorm default
ROW_ALIGN = 16       # row-tile alignment (covers f32 and bf16 sublane packing)

# pipeline_mode=pl.Buffered(1) support (constant weights need only one VMEM buffer).
try:
    _HAS_BUFFERED = (hasattr(pl, "Buffered")
                     and "pipeline_mode" in inspect.signature(pl.BlockSpec).parameters)
except Exception:  # pragma: no cover
    _HAS_BUFFERED = False


def _round_up(a, m):
    return (a + m - 1) // m * m


def _align_down(v, m):
    return max(m, (v // m) * m)


def _const_spec(shape):
    """BlockSpec for a grid-invariant (weight/bias) input: single-buffered when supported."""
    if _HAS_BUFFERED:
        return pl.BlockSpec(shape, lambda i: (0, 0), pipeline_mode=pl.Buffered(1))
    return pl.BlockSpec(shape, lambda i: (0, 0))


def _tc_per_chip():
    """2 TensorCores on v7x-class parts, 1 elsewhere (best-effort detection)."""
    try:
        kind = jax.devices()[0].device_kind.lower()
        if "v7" in kind or "7x" in kind:
            return 2
    except Exception:
        pass
    return 1


def _vmem_budget_bytes():
    """~80% of per-core VMEM capacity; conservative 64 MiB fallback if the query fails."""
    try:
        cap = int(pltpu.get_tpu_info().vmem_capacity_bytes)
    except Exception:
        cap = 64 * 1024 * 1024
    return int(cap * 0.8)


def _silu(x):
    # sigmoid(x) = 0.5*(tanh(0.5*x)+1): one EUP transcendental instead of exp + divide.
    return x * (0.5 * jnp.tanh(0.5 * x) + 0.5)


def _layernorm(h, gamma, beta, c_valid, mask):
    """LayerNorm over the last axis; padded feature columns (>= c_valid) are exactly zero on
    input and stay exactly zero on output (gamma/beta are zero-padded, diff is masked)."""
    mu = jnp.sum(h, axis=-1, keepdims=True) / c_valid
    diff = h - mu
    if mask is not None:                      # static (trace-time) branch
        diff = diff * mask
    var = jnp.sum(diff * diff, axis=-1, keepdims=True) / c_valid
    return diff * jax.lax.rsqrt(var + LN_EPS) * gamma + beta


def _residual_block_kernel(x_ref, wcat_ref, bcat_ref, g1_ref, be1_ref,
                           w2_ref, b2_ref, g2_ref, be2_ref, o_ref,
                           *, c_out, c_pad, fused_residual):
    x = x_ref[...]                                          # (T, x_feat) f32
    xb = x.astype(jnp.bfloat16)                             # cast in-kernel (VPU, hidden by MXU)

    # linear1 (and, when c_in != c_out, the residual linear fused into the same MXU pass).
    hc = jnp.dot(xb, wcat_ref[...], preferred_element_type=jnp.float32) + bcat_ref[...]
    if fused_residual:
        h = hc[:, :c_pad]                                   # 128-aligned lane slices
        res = hc[:, c_pad:]
    else:
        h = hc
        res = x                                             # exact f32 Identity skip (pre-padded)

    if c_pad != c_out:
        mask = (jax.lax.broadcasted_iota(jnp.int32, (1, c_pad), 1) < c_out).astype(jnp.float32)
    else:
        mask = None

    # block: LayerNorm -> SiLU -> Linear -> LayerNorm  (elementwise path stays in f32)
    h = _layernorm(h, g1_ref[...], be1_ref[...], c_out, mask)
    h = _silu(h)
    h = jnp.dot(h.astype(jnp.bfloat16), w2_ref[...],
                preferred_element_type=jnp.float32) + b2_ref[...]
    h = _layernorm(h, g2_ref[...], be2_ref[...], c_out, mask)

    # activation(block(x) + residual)
    y = h + res
    o_ref[...] = _silu(y).astype(o_ref.dtype)


def _pick_tile(n, tile_rows, budget, est_fn, tc_per_chip):
    tr = _align_down(min(tile_rows, _round_up(n, ROW_ALIGN)), ROW_ALIGN)
    # Shrink the row tile (not the VMEM limit) until the working set fits the budget.
    while tr > ROW_ALIGN and int(est_fn(tr) * 1.5) > budget:
        tr = _align_down(tr // 2, ROW_ALIGN)
    # Only on 2-TensorCore parts (v7x): keep >= 2 grid steps per core so each core pipelines.
    if tc_per_chip >= 2:
        min_steps = 2 * tc_per_chip
        while (tr > ROW_ALIGN and _round_up(n, tr) // tr < min_steps
               and n >= min_steps * ROW_ALIGN):
            tr = _align_down(tr // 2, ROW_ALIGN)
    n_pad = _round_up(n, tr)
    return tr, n_pad


@functools.partial(jax.jit, static_argnames=("c_out", "tile_rows", "out_dtype"))
def residual_block(x2d, prep, c_out, tile_rows=512, out_dtype=jnp.float32):
    """x2d: (N, C_in) float32; prep: dict from prepare_params(). Returns (N, c_out) out_dtype."""
    n, c_in = x2d.shape
    x_feat = prep["wcat"].shape[0]
    wcat_cols = prep["wcat"].shape[1]
    c_pad = prep["b2"].shape[1]
    fused_residual = (wcat_cols == 2 * c_pad)

    out_bytes = jnp.dtype(out_dtype).itemsize
    w_buf = 1 if _HAS_BUFFERED else 2

    def est(tr):   # working-set estimate in bytes
        return (2 * tr * x_feat * 4                              # x tiles (f32, double-buffered)
                + 2 * tr * c_pad * out_bytes                     # out tiles (double-buffered)
                + w_buf * ((x_feat * wcat_cols + c_pad * c_pad) * 2   # weights (bf16)
                           + 16 * c_pad * 4)                     # bias / LN vectors
                + tr * wcat_cols * 4                             # fused-matmul f32 result
                + 6 * tr * c_pad * 4)                            # in-body f32 intermediates

    budget = _vmem_budget_bytes()
    tr, n_pad = _pick_tile(n, tile_rows, budget, est, _tc_per_chip())
    grid = n_pad // tr
    vmem_limit = int(min(budget, max(int(est(tr) * 1.5), 32 * 1024 * 1024)))

    # x stays f32 — no wrapper-side bf16 copy pass.  Padding is only emitted when needed
    # (row pad for non-divisible N; feature pad only for the Identity-residual case).
    pad_rows = n_pad - n
    pad_feat = x_feat - c_in
    xk = x2d
    if pad_rows or pad_feat:
        xk = jnp.pad(x2d, ((0, pad_rows), (0, pad_feat)))

    kernel = functools.partial(_residual_block_kernel, c_out=c_out, c_pad=c_pad,
                               fused_residual=fused_residual)

    out = pl.pallas_call(
        kernel,
        out_shape=jax.ShapeDtypeStruct((n_pad, c_pad), out_dtype),
        grid_spec=pltpu.PrefetchScalarGridSpec(
            num_scalar_prefetch=0,
            grid=(grid,),
            in_specs=[
                pl.BlockSpec((tr, x_feat), lambda i: (i, 0)),   # x tile (f32)
                _const_spec((x_feat, wcat_cols)),               # w1 (| wr) fused   (bf16)
                _const_spec((1, wcat_cols)),                    # b1 (| br)
                _const_spec((1, c_pad)),                        # ln1 gamma
                _const_spec((1, c_pad)),                        # ln1 beta
                _const_spec((c_pad, c_pad)),                    # w2 (bf16)
                _const_spec((1, c_pad)),                        # b2
                _const_spec((1, c_pad)),                        # ln2 gamma
                _const_spec((1, c_pad)),                        # ln2 beta
            ],
            out_specs=pl.BlockSpec((tr, c_pad), lambda i: (i, 0)),
        ),
        compiler_params=pltpu.CompilerParams(
            # On v7x the "parallel" row axis should shard across both TensorCores.
            dimension_semantics=("parallel",),
            vmem_limit_bytes=vmem_limit,
        ),
    )(xk, prep["wcat"], prep["bcat"], prep["g1"], prep["be1"],
      prep["w2"], prep["b2"], prep["g2"], prep["be2"])

    if n_pad != n or c_pad != c_out:
        out = out[:n, :c_out]
    return out


def init_params(key, c_in, c_out):
    """PyTorch-like init: nn.Linear U(-1/sqrt(fan_in), 1/sqrt(fan_in)); nn.LayerNorm gamma=1,
    beta=0. Residual is Identity when c_in == c_out (wr/br = None), matching the module."""
    k1, k2, k3, k4, k5, k6 = jax.random.split(key, 6)

    def lin(kw, kb, fi, fo):
        bound = 1.0 / (fi ** 0.5)
        w = jax.random.uniform(kw, (fi, fo), jnp.float32, -bound, bound)
        b = jax.random.uniform(kb, (fo,), jnp.float32, -bound, bound)
        return w, b

    w1, b1 = lin(k1, k2, c_in, c_out)
    w2, b2 = lin(k3, k4, c_out, c_out)
    if c_in != c_out:
        wr, br = lin(k5, k6, c_in, c_out)
    else:
        wr, br = None, None
    ones = jnp.ones((c_out,), jnp.float32)
    zeros = jnp.zeros((c_out,), jnp.float32)
    return {"w1": w1, "b1": b1, "g1": ones, "be1": zeros,
            "w2": w2, "b2": b2, "g2": ones, "be2": zeros,
            "wr": wr, "br": br}


def prepare_params(raw, c_in, c_out):
    """Pad features to a multiple of 128 (lane-dense), fuse [w1 | wr] when the residual is a
    Linear, cast weights to bf16.  For the Identity residual no identity matrix is embedded:
    wcat = w1 only (rows zero-padded so the kernel can feed the 128-padded x tile through it)."""
    c_pad = _round_up(c_out, 128)
    pad_c = c_pad - c_out
    fused_residual = raw["wr"] is not None

    def row(v):  # (c_out,) -> (1, c_pad) f32, zero-padded
        return jnp.pad(v.reshape(1, -1).astype(jnp.float32), ((0, 0), (0, pad_c)))

    w1p = jnp.pad(raw["w1"].astype(jnp.float32), ((0, 0), (0, pad_c)))      # (c_in, c_pad)
    if fused_residual:
        wrp = jnp.pad(raw["wr"].astype(jnp.float32), ((0, 0), (0, pad_c)))
        wcat = jnp.concatenate([w1p, wrp], axis=1).astype(jnp.bfloat16)     # (c_in, 2*c_pad)
        bcat = jnp.concatenate([row(raw["b1"]), row(raw["br"])], axis=1)    # (1, 2*c_pad) f32
    else:
        assert c_in == c_out, "Identity residual requires c_in == c_out"
        x_feat = _round_up(c_in, 128)                                       # == c_pad
        wcat = jnp.pad(w1p, ((0, x_feat - c_in), (0, 0))).astype(jnp.bfloat16)  # (c_pad, c_pad)
        bcat = row(raw["b1"])                                               # (1, c_pad) f32
    w2p = jnp.pad(raw["w2"].astype(jnp.float32),
                  ((0, pad_c), (0, pad_c))).astype(jnp.bfloat16)            # (c_pad, c_pad)

    return {"wcat": wcat, "bcat": bcat,
            "g1": row(raw["g1"]), "be1": row(raw["be1"]),
            "w2": w2p, "b2": row(raw["b2"]),
            "g2": row(raw["g2"]), "be2": row(raw["be2"])}


def reference_forward(x2d, raw):
    """Pure-JAX reference mirroring the kernel numerics (bf16 matmul operands, f32 accumulation,
    f32 LayerNorm/SiLU, exact f32 Identity skip)."""
    bf = jnp.bfloat16

    def ln(h, g, b):
        mu = jnp.mean(h, axis=-1, keepdims=True)
        var = jnp.mean((h - mu) ** 2, axis=-1, keepdims=True)
        return (h - mu) * jax.lax.rsqrt(var + LN_EPS) * g + b

    xb = x2d.astype(bf)
    if raw["wr"] is not None:
        res = jnp.dot(xb, raw["wr"].astype(bf), preferred_element_type=jnp.float32) + raw["br"]
    else:
        res = x2d                                            # nn.Identity: exact f32 pass-through
    h = jnp.dot(xb, raw["w1"].astype(bf), preferred_element_type=jnp.float32) + raw["b1"]
    h = ln(h, raw["g1"], raw["be1"])
    h = h * jax.nn.sigmoid(h)
    h = jnp.dot(h.astype(bf), raw["w2"].astype(bf), preferred_element_type=jnp.float32) + raw["b2"]
    h = ln(h, raw["g2"], raw["be2"])
    y = h + res
    return y * jax.nn.sigmoid(y)


if __name__ == "__main__":
    key = jax.random.PRNGKey(0)
    kx1, kx2, kp1, kp2 = jax.random.split(key, 4)

    batch, seq = 2, 8

    # Case 1: in_channels != out_channels  ->  Linear residual (fused [w1 | wr] matmul).
    c_in1, c_out1 = 32, 64
    x1 = jax.random.normal(kx1, (batch, seq, c_in1), jnp.float32)
    raw1 = init_params(kp1, c_in1, c_out1)
    prep1 = prepare_params(raw1, c_in1, c_out1)
    out1 = residual_block(x1.reshape(-1, c_in1), prep1, c_out=c_out1)
    out1 = out1.reshape(batch, seq, c_out1)
    jax.block_until_ready(out1)
    ref1 = reference_forward(x1.reshape(-1, c_in1), raw1).reshape(batch, seq, c_out1)
    assert jnp.allclose(out1, ref1, atol=2e-3, rtol=2e-3), "mismatch (linear residual)"

    # Case 2: in_channels == out_channels  ->  Identity residual (exact f32 skip, no x @ I).
    c2 = 64
    x2 = jax.random.normal(kx2, (batch, seq, c2), jnp.float32)
    raw2 = init_params(kp2, c2, c2)
    prep2 = prepare_params(raw2, c2, c2)
    out2 = residual_block(x2.reshape(-1, c2), prep2, c_out=c2)
    out2 = out2.reshape(batch, seq, c2)
    jax.block_until_ready(out2)
    ref2 = reference_forward(x2.reshape(-1, c2), raw2).reshape(batch, seq, c2)
    assert jnp.allclose(out2, ref2, atol=2e-3, rtol=2e-3), "mismatch (identity residual)"

    print("KERNEL_OK")
</pallas_src>

<mosaic_0001>
module attributes {stable_mosaic.version = 11 : i64} {
  func.func @_residual_block_kernel(%arg0: i32, %arg1: memref<16x32xf32, #tpu.memory_space<vmem>>, %arg2: memref<32x256xbf16, #tpu.memory_space<vmem>>, %arg3: memref<1x256xf32, #tpu.memory_space<vmem>>, %arg4: memref<1x128xf32, #tpu.memory_space<vmem>>, %arg5: memref<1x128xf32, #tpu.memory_space<vmem>>, %arg6: memref<128x128xbf16, #tpu.memory_space<vmem>>, %arg7: memref<1x128xf32, #tpu.memory_space<vmem>>, %arg8: memref<1x128xf32, #tpu.memory_space<vmem>>, %arg9: memref<1x128xf32, #tpu.memory_space<vmem>>, %arg10: memref<16x128xf32, #tpu.memory_space<vmem>>) attributes {dimension_semantics = [#tpu.dimension_semantics<parallel>], iteration_bounds = array<i64: 1>, scalar_prefetch = 0 : i64, scratch_operands = 0 : i64, tpu.core_type = #tpu.core_type<tc>, window_params = [{transform_indices = @transform_0, window_bounds = array<i64: 16, 32>}, {pipeline_mode = #tpu.pipeline_mode<synchronous>, transform_indices = @transform_1, window_bounds = array<i64: 32, 256>}, {pipeline_mode = #tpu.pipeline_mode<synchronous>, transform_indices = @transform_2, window_bounds = array<i64: 1, 256>}, {pipeline_mode = #tpu.pipeline_mode<synchronous>, transform_indices = @transform_3, window_bounds = array<i64: 1, 128>}, {pipeline_mode = #tpu.pipeline_mode<synchronous>, transform_indices = @transform_4, window_bounds = array<i64: 1, 128>}, {pipeline_mode = #tpu.pipeline_mode<synchronous>, transform_indices = @transform_5, window_bounds = array<i64: 128, 128>}, {pipeline_mode = #tpu.pipeline_mode<synchronous>, transform_indices = @transform_6, window_bounds = array<i64: 1, 128>}, {pipeline_mode = #tpu.pipeline_mode<synchronous>, transform_indices = @transform_7, window_bounds = array<i64: 1, 128>}, {pipeline_mode = #tpu.pipeline_mode<synchronous>, transform_indices = @transform_8, window_bounds = array<i64: 1, 128>}, {transform_indices = @transform_9, window_bounds = array<i64: 16, 128>}]} {
    %c0 = arith.constant 0 : index
    %c0_0 = arith.constant 0 : index
    %0 = vector.load %arg1[%c0, %c0_0] : memref<16x32xf32, #tpu.memory_space<vmem>>, vector<16x32xf32>
    %1 = arith.truncf %0 : vector<16x32xf32> to vector<16x32xbf16>
    %c0_1 = arith.constant 0 : index
    %c0_2 = arith.constant 0 : index
    %2 = vector.load %arg2[%c0_1, %c0_2] : memref<32x256xbf16, #tpu.memory_space<vmem>>, vector<32x256xbf16>
    %cst = arith.constant dense<0.000000e+00> : vector<16x256xf32>
    %3 = tpu.matmul %1, %2, %cst {dimension_numbers = #tpu.dot_dimension_numbers<[1], [0], [0], [1], [0, 0, 1, 1], [], []>} : vector<16x32xbf16>, vector<32x256xbf16>, vector<16x256xf32> -> vector<16x256xf32>
    %c0_3 = arith.constant 0 : index
    %c0_4 = arith.constant 0 : index
    %4 = vector.load %arg3[%c0_3, %c0_4] : memref<1x256xf32, #tpu.memory_space<vmem>>, vector<1x256xf32>
    %5 = vector.broadcast %4 : vector<1x256xf32> to vector<16x256xf32>
    %6 = arith.addf %3, %5 : vector<16x256xf32>
    %7 = vector.extract_strided_slice %6 {offsets = [0, 0], sizes = [16, 128], strides = [1, 1]} : vector<16x256xf32> to vector<16x128xf32>
    %8 = vector.extract_strided_slice %6 {offsets = [0, 128], sizes = [16, 128], strides = [1, 1]} : vector<16x256xf32> to vector<16x128xf32>
    %9 = tpu.iota {dimensions = array<i32: 1>} : vector<1x128xi32>
    %c64_i32 = arith.constant 64 : i32
    %10 = vector.broadcast %c64_i32 : i32 to vector<1x128xi32>
    %11 = arith.cmpi slt, %9, %10 : vector<1x128xi32>
    %12 = arith.extui %11 : vector<1x128xi1> to vector<1x128xi32>
    %13 = arith.sitofp %12 : vector<1x128xi32> to vector<1x128xf32>
    %c0_5 = arith.constant 0 : index
    %c0_6 = arith.constant 0 : index
    %14 = vector.load %arg4[%c0_5, %c0_6] : memref<1x128xf32, #tpu.memory_space<vmem>>, vector<1x128xf32>
    %c0_7 = arith.constant 0 : index
    %c0_8 = arith.constant 0 : index
    %15 = vector.load %arg5[%c0_7, %c0_8] : memref<1x128xf32, #tpu.memory_space<vmem>>, vector<1x128xf32>
    %cst_9 = arith.constant dense<0.000000e+00> : vector<16xf32>
    %16 = vector.multi_reduction <add>, %7, %cst_9 [1] : vector<16x128xf32> to vector<16xf32>
    %17 = vector.shape_cast %16 : vector<16xf32> to vector<16x1xf32>
    %cst_10 = arith.constant 6.400000e+01 : f32
    %18 = vector.broadcast %cst_10 : f32 to vector<16x1xf32>
    %19 = arith.divf %17, %18 : vector<16x1xf32>
    %20 = vector.broadcast %19 : vector<16x1xf32> to vector<16x128xf32>
    %21 = arith.subf %7, %20 : vector<16x128xf32>
    %22 = vector.broadcast %13 : vector<1x128xf32> to vector<16x128xf32>
    %23 = arith.mulf %21, %22 : vector<16x128xf32>
    %24 = arith.mulf %23, %23 : vector<16x128xf32>
    %cst_11 = arith.constant dense<0.000000e+00> : vector<16xf32>
    %25 = vector.multi_reduction <add>, %24, %cst_11 [1] : vector<16x128xf32> to vector<16xf32>
    %26 = vector.shape_cast %25 : vector<16xf32> to vector<16x1xf32>
    %cst_12 = arith.constant 6.400000e+01 : f32
    %27 = vector.broadcast %cst_12 : f32 to vector<16x1xf32>
    %28 = arith.divf %26, %27 : vector<16x1xf32>
    %cst_13 = arith.constant 9.99999974E-6 : f32
    %29 = vector.broadcast %cst_13 : f32 to vector<16x1xf32>
    %30 = arith.addf %28, %29 : vector<16x1xf32>
    %31 = math.rsqrt %30 : vector<16x1xf32>
    %32 = vector.broadcast %31 : vector<16x1xf32> to vector<16x128xf32>
    %33 = arith.mulf %23, %32 : vector<16x128xf32>
    %34 = vector.broadcast %14 : vector<1x128xf32> to vector<16x128xf32>
    %35 = arith.mulf %33, %34 : vector<16x128xf32>
    %36 = vector.broadcast %15 : vector<1x128xf32> to vector<16x128xf32>
    %37 = arith.addf %35, %36 : vector<16x128xf32>
    %cst_14 = arith.constant 5.000000e-01 : f32
    %38 = vector.broadcast %cst_14 : f32 to vector<16x128xf32>
    %39 = arith.mulf %38, %37 : vector<16x128xf32>
    %40 = math.tanh %39 : vector<16x128xf32>
    %cst_15 = arith.constant 5.000000e-01 : f32
    %41 = vector.broadcast %cst_15 : f32 to vector<16x128xf32>
    %42 = arith.mulf %41, %40 : vector<16x128xf32>
    %cst_16 = arith.constant 5.000000e-01 : f32
    %43 = vector.broadcast %cst_16 : f32 to vector<16x128xf32>
    %44 = arith.addf %42, %43 : vector<16x128xf32>
    %45 = arith.mulf %37, %44 : vector<16x128xf32>
    %46 = arith.truncf %45 : vector<16x128xf32> to vector<16x128xbf16>
    %c0_17 = arith.constant 0 : index
    %c0_18 = arith.constant 0 : index
    %47 = vector.load %arg6[%c0_17, %c0_18] : memref<128x128xbf16, #tpu.memory_space<vmem>>, vector<128x128xbf16>
    %cst_19 = arith.constant dense<0.000000e+00> : vector<16x128xf32>
    %48 = tpu.matmul %46, %47, %cst_19 {dimension_numbers = #tpu.dot_dimension_numbers<[1], [0], [0], [1], [0, 0, 1, 1], [], []>} : vector<16x128xbf16>, vector<128x128xbf16>, vector<16x128xf32> -> vector<16x128xf32>
    %c0_20 = arith.constant 0 : index
    %c0_21 = arith.constant 0 : index
    %49 = vector.load %arg7[%c0_20, %c0_21] : memref<1x128xf32, #tpu.memory_space<vmem>>, vector<1x128xf32>
    %50 = vector.broadcast %49 : vector<1x128xf32> to vector<16x128xf32>
    %51 = arith.addf %48, %50 : vector<16x128xf32>
    %c0_22 = arith.constant 0 : index
    %c0_23 = arith.constant 0 : index
    %52 = vector.load %arg8[%c0_22, %c0_23] : memref<1x128xf32, #tpu.memory_space<vmem>>, vector<1x128xf32>
    %c0_24 = arith.constant 0 : index
    %c0_25 = arith.constant 0 : index
    %53 = vector.load %arg9[%c0_24, %c0_25] : memref<1x128xf32, #tpu.memory_space<vmem>>, vector<1x128xf32>
    %cst_26 = arith.constant dense<0.000000e+00> : vector<16xf32>
    %54 = vector.multi_reduction <add>, %51, %cst_26 [1] : vector<16x128xf32> to vector<16xf32>
    %55 = vector.shape_cast %54 : vector<16xf32> to vector<16x1xf32>
    %cst_27 = arith.constant 6.400000e+01 : f32
    %56 = vector.broadcast %cst_27 : f32 to vector<16x1xf32>
    %57 = arith.divf %55, %56 : vector<16x1xf32>
    %58 = vector.broadcast %57 : vector<16x1xf32> to vector<16x128xf32>
    %59 = arith.subf %51, %58 : vector<16x128xf32>
    %60 = vector.broadcast %13 : vector<1x128xf32> to vector<16x128xf32>
    %61 = arith.mulf %59, %60 : vector<16x128xf32>
    %62 = arith.mulf %61, %61 : vector<16x128xf32>
    %cst_28 = arith.constant dense<0.000000e+00> : vector<16xf32>
    %63 = vector.multi_reduction <add>, %62, %cst_28 [1] : vector<16x128xf32> to vector<16xf32>
    %64 = vector.shape_cast %63 : vector<16xf32> to vector<16x1xf32>
    %cst_29 = arith.constant 6.400000e+01 : f32
    %65 = vector.broadcast %cst_29 : f32 to vector<16x1xf32>
    %66 = arith.divf %64, %65 : vector<16x1xf32>
    %cst_30 = arith.constant 9.99999974E-6 : f32
    %67 = vector.broadcast %cst_30 : f32 to vector<16x1xf32>
    %68 = arith.addf %66, %67 : vector<16x1xf32>
    %69 = math.rsqrt %68 : vector<16x1xf32>
    %70 = vector.broadcast %69 : vector<16x1xf32> to vector<16x128xf32>
    %71 = arith.mulf %61, %70 : vector<16x128xf32>
    %72 = vector.broadcast %52 : vector<1x128xf32> to vector<16x128xf32>
    %73 = arith.mulf %71, %72 : vector<16x128xf32>
    %74 = vector.broadcast %53 : vector<1x128xf32> to vector<16x128xf32>
    %75 = arith.addf %73, %74 : vector<16x128xf32>
    %76 = arith.addf %75, %8 : vector<16x128xf32>
    %cst_31 = arith.constant 5.000000e-01 : f32
    %77 = vector.broadcast %cst_31 : f32 to vector<16x128xf32>
    %78 = arith.mulf %77, %76 : vector<16x128xf32>
    %79 = math.tanh %78 : vector<16x128xf32>
    %cst_32 = arith.constant 5.000000e-01 : f32
    %80 = vector.broadcast %cst_32 : f32 to vector<16x128xf32>
    %81 = arith.mulf %80, %79 : vector<16x128xf32>
    %cst_33 = arith.constant 5.000000e-01 : f32
    %82 = vector.broadcast %cst_33 : f32 to vector<16x128xf32>
    %83 = arith.addf %81, %82 : vector<16x128xf32>
    %84 = arith.mulf %76, %83 : vector<16x128xf32>
    %c0_34 = arith.constant 0 : index
    %c0_35 = arith.constant 0 : index
    %85 = vector.load %arg10[%c0_34, %c0_35] : memref<16x128xf32, #tpu.memory_space<vmem>>, vector<16x128xf32>
    tpu.vector_store %arg10[%c0_34, %c0_35], %84 {strides = array<i32>} : memref<16x128xf32, #tpu.memory_space<vmem>>, vector<16x128xf32>,
    return
  }
  func.func @transform_0(%arg0: i32) -> (i32, i32) {
    %c0_i32 = arith.constant 0 : i32
    %c0_i32_0 = arith.constant 0 : i32
    return %arg0, %c0_i32 : i32, i32
  }
  func.func @transform_1(%arg0: i32) -> (i32, i32) {
    %c0_i32 = arith.constant 0 : i32
    %c0_i32_0 = arith.constant 0 : i32
    %c0_i32_1 = arith.constant 0 : i32
    return %c0_i32, %c0_i32_0 : i32, i32
  }
  func.func @transform_2(%arg0: i32) -> (i32, i32) {
    %c0_i32 = arith.constant 0 : i32
    %c0_i32_0 = arith.constant 0 : i32
    %c0_i32_1 = arith.constant 0 : i32
    return %c0_i32, %c0_i32_0 : i32, i32
  }
  func.func @transform_3(%arg0: i32) -> (i32, i32) {
    %c0_i32 = arith.constant 0 : i32
    %c0_i32_0 = arith.constant 0 : i32
    %c0_i32_1 = arith.constant 0 : i32
    return %c0_i32, %c0_i32_0 : i32, i32
  }
  func.func @transform_4(%arg0: i32) -> (i32, i32) {
    %c0_i32 = arith.constant 0 : i32
    %c0_i32_0 = arith.constant 0 : i32
    %c0_i32_1 = arith.constant 0 : i32
    return %c0_i32, %c0_i32_0 : i32, i32
  }
  func.func @transform_5(%arg0: i32) -> (i32, i32) {
    %c0_i32 = arith.constant 0 : i32
    %c0_i32_0 = arith.constant 0 : i32
    %c0_i32_1 = arith.constant 0 : i32
    return %c0_i32, %c0_i32_0 : i32, i32
  }
  func.func @transform_6(%arg0: i32) -> (i32, i32) {
    %c0_i32 = arith.constant 0 : i32
    %c0_i32_0 = arith.constant 0 : i32
    %c0_i32_1 = arith.constant 0 : i32
    return %c0_i32, %c0_i32_0 : i32, i32
  }
  func.func @transform_7(%arg0: i32) -> (i32, i32) {
    %c0_i32 = arith.constant 0 : i32
    %c0_i32_0 = arith.constant 0 : i32
    %c0_i32_1 = arith.constant 0 : i32
    return %c0_i32, %c0_i32_0 : i32, i32
  }
  func.func @transform_8(%arg0: i32) -> (i32, i32) {
    %c0_i32 = arith.constant 0 : i32
    %c0_i32_0 = arith.constant 0 : i32
    %c0_i32_1 = arith.constant 0 : i32
    return %c0_i32, %c0_i32_0 : i32, i32
  }
  func.func @transform_9(%arg0: i32) -> (i32, i32) {
    %c0_i32 = arith.constant 0 : i32
    %c0_i32_0 = arith.constant 0 : i32
    return %arg0, %c0_i32 : i32, i32
  }
}

</mosaic_0001>

<llo_original>
// kernel: residual_block.1
$region0: #{residual_block.1}
  #allocation0 [shape = 'u32[]', space=smem, size = 0x4, offset = 0x4, fixed_abs, tag = 'smem constant byte address 0x4 - core index']
  #allocation1 [shape = 'u32[144,128]{1,0:T(1,128)}', space=vmem, size = 0x12000, scoped, tag = 'internal scratch']
  %s0 = inlined_call_operand.hbm [shape: f32[16,32], index: 0, kind: input, shape index: {}]
  %s1 = inlined_call_operand.hbm [shape: bf16[32,256], index: 1, kind: input, shape index: {}]
  %s2 = inlined_call_operand.vmem [shape: f32[1,256], index: 2, kind: input, shape index: {}]
  %s3 = inlined_call_operand.vmem [shape: f32[1,128], index: 3, kind: input, shape index: {}]
  %s4 = inlined_call_operand.vmem [shape: f32[1,128], index: 4, kind: input, shape index: {}]
  %s5 = inlined_call_operand.hbm [shape: bf16[128,128], index: 5, kind: input, shape index: {}]
  %s6 = inlined_call_operand.hbm [shape: f32[1,128], index: 6, kind: input, shape index: {}]
  %s7 = inlined_call_operand.vmem [shape: f32[1,128], index: 7, kind: input, shape index: {}]
  %s8 = inlined_call_operand.vmem [shape: f32[1,128], index: 8, kind: input, shape index: {}]
  %s9 = inlined_call_operand.hbm [shape: f32[16,128], index: 9, kind: output, shape index: {}]
  %s10 = sld [smem:[#allocation0]]
  $region62: #{residual_block.1} parent=0
    _
  %s12 = ssub.s32 1, %s10
  %s13 = scalar_select 0, %s12, %s10
  $region1: #{residual_block.1} parent=0
    #allocation2 [shape = 'u8[8192]{0}', space=vmem, size = 0x2000, scoped, tag = 'input window, operand 0, single buffered']
    #allocation3 [shape = 's32[1]{0}', space=sflag, size = 0x4, scoped, tag = 'scoped memory for residual_block.1']
    #allocation4 [shape = 's32[1]{0}', space=sflag, size = 0x4, scoped, tag = 'scoped memory for residual_block.1']
    #allocation5 [shape = 'u8[16384]{0}', space=vmem, size = 0x4000, scoped, tag = 'input window, operand 1, single buffered']
    #allocation6 [shape = 's32[1]{0}', space=sflag, size = 0x4, scoped, tag = 'scoped memory for residual_block.1']
    #allocation7 [shape = 'u8[32768]{0}', space=vmem, size = 0x8000, scoped, tag = 'input window, operand 5, single buffered']
    #allocation8 [shape = 'u8[512]{0}', space=vmem, size = 0x400, scoped, tag = 'input window, operand 6, single buffered']
    #allocation9 [shape = 's32[1]{0}', space=sflag, size = 0x4, scoped, tag = 'scoped memory for residual_block.1']
    #allocation10 [shape = 'u8[8192]{0}', space=vmem, size = 0x2000, scoped, tag = 'output window, operand 0, single buffered']
    %14 = vsyncpa [#allocation3], 0
    %15 = vsyncpa [#allocation6], 0
    %16 = vsyncpa [#allocation9], 0
    %17 = vsyncpa [#allocation4], 0
    // Predicated region
    $region2: #{residual_block.1} parent=1 // pred_check
      _
    $region3: #{residual_block.1} parent=1 // pred_check_branch
      %19 = sbr.rel (0) target = $region5
    $region4: #{residual_block.1} parent=1 // pred_region
      %s21 = ssub.s32 256, 256
      %22 = vsyncadd [#allocation3], %s21
      %s23 = sshll.u32 [#allocation2], 4
      %s24 = int_to_ptr.vmem [resolvable:$true] %s23
      %29 = dma.hbm_to_vmem [thread:$0]  %s0, 256, %s24, [#allocation3], 128, 128, 8
    $region5: #{residual_block.1} parent=1 // pred_fallthru
      _
    // Predicated region
    $region6: #{residual_block.1} parent=1 // pred_check
      _
    $region7: #{residual_block.1} parent=1 // pred_check_branch
      %31 = sbr.rel (0) target = $region9
    $region8: #{residual_block.1} parent=1 // pred_region
      %s33 = ssub.s32 512, 512
      %34 = vsyncadd [#allocation6], %s33
      %s35 = sshll.u32 [#allocation5], 4
      %s36 = int_to_ptr.vmem [resolvable:$true] %s35
      %41 = dma.hbm_to_vmem [thread:$0]  %s1, 512, %s36, [#allocation6], 128, 128, 8
    $region9: #{residual_block.1} parent=1 // pred_fallthru
      _
    // Predicated region
    $region10: #{residual_block.1} parent=1 // pred_check
      _
    $region11: #{residual_block.1} parent=1 // pred_check_branch
      %43 = sbr.rel (0) target = $region13
    $region12: #{residual_block.1} parent=1 // pred_region
      _
    $region13: #{residual_block.1} parent=1 // pred_fallthru
      _
    // Predicated region
    $region14: #{residual_block.1} parent=1 // pred_check
      _
    $region15: #{residual_block.1} parent=1 // pred_check_branch
      %45 = sbr.rel (0) target = $region17
    $region16: #{residual_block.1} parent=1 // pred_region
      _
    $region17: #{residual_block.1} parent=1 // pred_fallthru
      _
    // Predicated region
    $region18: #{residual_block.1} parent=1 // pred_check
      _
    $region19: #{residual_block.1} parent=1 // pred_check_branch
      %47 = sbr.rel (0) target = $region21
    $region20: #{residual_block.1} parent=1 // pred_region
      _
    $region21: #{residual_block.1} parent=1 // pred_fallthru
      _
    // Predicated region
    $region22: #{residual_block.1} parent=1 // pred_check
      _
    $region23: #{residual_block.1} parent=1 // pred_check_branch
      %49 = sbr.rel (0) target = $region25
    $region24: #{residual_block.1} parent=1 // pred_region
      %s51 = ssub.s32 1024, 1024
      %52 = vsyncadd [#allocation6], %s51
      %s53 = sshll.u32 [#allocation7], 4
      %s54 = int_to_ptr.vmem [resolvable:$true] %s53
      %59 = dma.hbm_to_vmem [thread:$0]  %s5, 1024, %s54, [#allocation6], 64, 64, 4
    $region25: #{residual_block.1} parent=1 // pred_fallthru
      _
    // Predicated region
    $region26: #{residual_block.1} parent=1 // pred_check
      _
    $region27: #{residual_block.1} parent=1 // pred_check_branch
      %61 = sbr.rel (0) target = $region29
    $region28: #{residual_block.1} parent=1 // pred_region
      %s63 = ssub.s32 16, 16
      %64 = vsyncadd [#allocation9], %s63
      %s66 = sshll.u32 [#allocation8], 4
      %s67 = int_to_ptr.vmem [resolvable:$true] %s66
      %69 = dma.hbm_to_vmem [thread:$0]  %s6, 16, %s67, [#allocation9]
    $region29: #{residual_block.1} parent=1 // pred_fallthru
      _
    // Predicated region
    $region30: #{residual_block.1} parent=1 // pred_check
      _
    $region31: #{residual_block.1} parent=1 // pred_check_branch
      %71 = sbr.rel (0) target = $region33
    $region32: #{residual_block.1} parent=1 // pred_region
      _
    $region33: #{residual_block.1} parent=1 // pred_fallthru
      _
    // Predicated region
    $region34: #{residual_block.1} parent=1 // pred_check
      _
    $region35: #{residual_block.1} parent=1 // pred_check_branch
      %73 = sbr.rel (0) target = $region37
    $region36: #{residual_block.1} parent=1 // pred_region
      _
    $region37: #{residual_block.1} parent=1 // pred_fallthru
      _
    // Predicated region
    $region38: #{residual_block.1} parent=1 // pred_check
      _
    $region39: #{residual_block.1} parent=1 // pred_check_branch
      %75 = sbr.rel (0) target = $region41
    $region40: #{residual_block.1} parent=1 // pred_region
      %76 = dma.done [#allocation3], 256
    $region41: #{residual_block.1} parent=1 // pred_fallthru
      _
    // Predicated region
    $region42: #{residual_block.1} parent=1 // pred_check
      _
    $region43: #{residual_block.1} parent=1 // pred_check_branch
      %78 = sbr.rel (0) target = $region45
    $region44: #{residual_block.1} parent=1 // pred_region
      %79 = dma.done [#allocation6], 512
    $region45: #{residual_block.1} parent=1 // pred_fallthru
      _
    // Predicated region
    $region46: #{residual_block.1} parent=1 // pred_check
      _
    $region47: #{residual_block.1} parent=1 // pred_check_branch
      %81 = sbr.rel (0) target = $region49
    $region48: #{residual_block.1} parent=1 // pred_region
      %82 = dma.done [#allocation6], 1024
    $region49: #{residual_block.1} parent=1 // pred_fallthru
      _
    // Predicated region
    $region50: #{residual_block.1} parent=1 // pred_check
      _
    $region51: #{residual_block.1} parent=1 // pred_check_branch
      %84 = sbr.rel (0) target = $region53
    $region52: #{residual_block.1} parent=1 // pred_region
      %85 = dma.done [#allocation9], 16
    $region53: #{residual_block.1} parent=1 // pred_fallthru
      _
    %v87 = vld [vmem:[#allocation2] sm:$0xff]
    %v88 = vld [vmem:[#allocation2 + $0x8] sm:$0xff]
    %v89 = vpack.c.bf16 %v88, %v87
    %v90 = vld [vmem:[#allocation5] sm:$0xff]
    %v91 = vld [vmem:[#allocation5 + $0x8] sm:$0xff]
    %v92 = vld [vmem:[#allocation5 + $0x10] sm:$0xff]
    %v93 = vld [vmem:[#allocation5 + $0x18] sm:$0xff]
    %v94 = vld [vmem:[%s2] sm:$0x3]
    %v96 = vlaneseq
    %v97 = vshrl.u32 %v96, 7
    %v98 = vsub.s32 0, %v97
    %v99 = vrot.slane %v94, %v98
    %v100 = vlaneseq
    %v101 = vshrl.u32 %v100, 7
    %v102 = vsub.s32 1, %v101
    %v103 = vrot.slane %v94, %v102
    %v110 = vunpack.c.l.b16 %v90
    %v111 = vunpack.c.h.b16 %v90
    %v112 = vunpack.c.l.b16 %v91
    %v113 = vunpack.c.h.b16 %v91
    %v114 = vunpack.c.l.b16 %v92
    %v115 = vunpack.c.h.b16 %v92
    %v116 = vunpack.c.l.b16 %v93
    %v117 = vunpack.c.h.b16 %v93
    %v118 = vpack.c.b16 %v112, %v110
    %v119 = vpack.c.b16 %v113, %v111
    %v120 = vpack.c.b16 %v116, %v114
    %v121 = vpack.c.b16 %v117, %v115
    %vm126 = vcmask 261120
    %v128 = vsel %vm126, %v89, 0
    %130 = vmatprep.subr.bf16.mxu0 %v119
    %131 = vmatpush1.bf16.msra.mxu0 %v118
    %132 = vmatprep.subr.bf16.mxu0 %v121
    %133 = vmatpush1.bf16.msra.mxu0 %v120
    %134 = vmatprep.subr.bf16.mxu0 0
    %135 = vmatpush1.bf16.msra.mxu0 0
    %136 = vmatprep.subr.bf16.mxu0 0
    %137 = vmatpush1.bf16.msra.mxu0 0
    %138 = vmatprep.subr.bf16.mxu0 0
    %139 = vmatpush1.bf16.msra.mxu0 0
    %140 = vmatprep.subr.bf16.mxu0 0
    %141 = vmatpush1.bf16.msra.mxu0 0
    %142 = vmatprep.subr.bf16.mxu0 0
    %143 = vmatpush1.bf16.msra.mxu0 0
    %144 = vmatprep.subr.bf16.mxu0 0
    %145 = vmatpush1.bf16.msra.mxu0 0
    %146 = vmatprep.subr.bf16.mxu0 0
    %147 = vmatpush1.bf16.msra.mxu0 0
    %148 = vmatprep.subr.bf16.mxu0 0
    %149 = vmatpush1.bf16.msra.mxu0 0
    %150 = vmatprep.subr.bf16.mxu0 0
    %151 = vmatpush1.bf16.msra.mxu0 0
    %152 = vmatprep.subr.bf16.mxu0 0
    %153 = vmatpush1.bf16.msra.mxu0 0
    %154 = vmatprep.subr.bf16.mxu0 0
    %155 = vmatpush1.bf16.msra.mxu0 0
    %156 = vmatprep.subr.bf16.mxu0 0
    %157 = vmatpush1.bf16.msra.mxu0 0
    %158 = vmatprep.subr.bf16.mxu0 0
    %159 = vmatpush1.bf16.msra.mxu0 0
    %160 = vmatprep.subr.bf16.mxu0 0
    %161 = vmatpush1.bf16.msra.mxu0 0
    %162 = vmatprep.mubr.bf16.mxu0 0
    %163 = vmatmul.mubr.bf16.gmra.mrb[0].mxu0 %v128
    %v164 = vpop.f32.mrb[0].mxu0
    %v165 = vadd.f32 %v99, %v164
    %v166 = vpop.f32.mrb[0].mxu0
    %v167 = vadd.f32 %v103, %v166
    %v168 = vpop.f32.mrb[0].mxu0
    %v169 = vadd.f32 %v99, %v168
    %v170 = vpop.f32.mrb[0].mxu0
    %v171 = vadd.f32 %v103, %v170
    %172 = vdwg.mxu0
    %v173 = vlaneseq
    %v174 = vand.u32 %v173, 127
    %vm175 = vcmp.lt.s32.totalorder %v174, 64
    %v176 = vsel %vm175, 1, 0
    %v177 = vcvt.s32.f32 %v176
    %v178 = vld [vmem:[%s3] sm:$0x1]
    %v179 = vld [vmem:[%s4] sm:$0x1]
    %180 = vadd.xlane.f32.xlu0 %v165
    %v181 = vpop.xlane.xlu0 %180
    %182 = vadd.xlane.f32.xlu0 %v169
    %v183 = vpop.xlane.xlu0 %182
    %v184 = vrcp.pop 64.0
    %v185 = vmul.f32 %v181, %v184
    %v186 = vmul.f32 %v183, %v184
    %v187 = vsub.f32 %v165, %v185
    %v188 = vsub.f32 %v169, %v186
    %v189 = vmul.f32 %v187, %v177
    %v190 = vmul.f32 %v188, %v177
    %v191 = vmul.f32 %v189, %v189
    %v192 = vmul.f32 %v190, %v190
    %193 = vadd.xlane.f32.xlu0 %v191
    %v194 = vpop.xlane.xlu0 %193
    %195 = vadd.xlane.f32.xlu0 %v192
    %v196 = vpop.xlane.xlu0 %195
    %v197 = vmul.f32 %v194, %v184
    %v198 = vmul.f32 %v196, %v184
    %v199 = vadd.f32 %v197, 1e-05
    %v200 = vadd.f32 %v198, 1e-05
    %v201 = vrsqrt.pop %v199
    %v202 = vrsqrt.pop %v200
    %v203 = vmul.f32 %v189, %v201
    %v204 = vmul.f32 %v190, %v202
    %v206 = vlaneseq
    %v207 = vshrl.u32 %v206, 7
    %v208 = vsub.s32 0, %v207
    %v209 = vrot.slane %v178, %v208
    %v211 = vmul.f32 %v203, %v209
    %v212 = vmul.f32 %v204, %v209
    %v214 = vlaneseq
    %v215 = vshrl.u32 %v214, 7
    %v216 = vsub.s32 0, %v215
    %v217 = vrot.slane %v179, %v216
    %v219 = vadd.f32 %v211, %v217
    %v220 = vadd.f32 %v212, %v217
    %v221 = vmul.f32 %v219, 0.5
    %v222 = vmul.f32 %v220, 0.5
    %v223 = vtanh.pop %v221
    %v224 = vtanh.pop %v222
    %v225 = vmul.f32 %v223, 0.5
    %v226 = vmul.f32 %v224, 0.5
    %v227 = vadd.f32 %v225, 0.5
    %v228 = vadd.f32 %v226, 0.5
    %v229 = vmul.f32 %v219, %v227
    %v230 = vmul.f32 %v220, %v228
    %v231 = vpack.c.bf16 %v230, %v229
    %v232 = vld [vmem:[#allocation7] sm:$0xf]
    %v233 = vld [vmem:[#allocation7 + $0x4] sm:$0xf]
    %v234 = vld [vmem:[#allocation7 + $0x8] sm:$0xf]
    %v235 = vld [vmem:[#allocation7 + $0xc] sm:$0xf]
    %v236 = vld [vmem:[#allocation7 + $0x10] sm:$0xf]
    %v237 = vld [vmem:[#allocation7 + $0x14] sm:$0xf]
    %v238 = vld [vmem:[#allocation7 + $0x18] sm:$0xf]
    %v239 = vld [vmem:[#allocation7 + $0x1c] sm:$0xf]
    %v240 = vld [vmem:[#allocation7 + $0x20] sm:$0xf]
    %v241 = vld [vmem:[#allocation7 + $0x24] sm:$0xf]
    %v242 = vld [vmem:[#allocation7 + $0x28] sm:$0xf]
    %v243 = vld [vmem:[#allocation7 + $0x2c] sm:$0xf]
    %v244 = vld [vmem:[#allocation7 + $0x30] sm:$0xf]
    %v245 = vld [vmem:[#allocation7 + $0x34] sm:$0xf]
    %v246 = vld [vmem:[#allocation7 + $0x38] sm:$0xf]
    %v247 = vld [vmem:[#allocation7 + $0x3c] sm:$0xf]
    %v248 = vld [vmem:[#allocation8] sm:$0x1]
    %v250 = vlaneseq
    %v251 = vshrl.u32 %v250, 7
    %v252 = vsub.s32 0, %v251
    %v253 = vrot.slane %v248, %v252
    %v271 = vunpack.c.l.b16 %v232
    %v272 = vunpack.c.l.b16 %v233
    %v273 = vunpack.c.l.b16 %v234
    %v274 = vunpack.c.l.b16 %v235
    %v275 = vunpack.c.l.b16 %v236
    %v276 = vunpack.c.l.b16 %v237
    %v277 = vunpack.c.l.b16 %v238
    %v278 = vunpack.c.l.b16 %v239
    %v279 = vunpack.c.l.b16 %v240
    %v280 = vunpack.c.l.b16 %v241
    %v281 = vunpack.c.l.b16 %v242
    %v282 = vunpack.c.l.b16 %v243
    %v283 = vunpack.c.l.b16 %v244
    %v284 = vunpack.c.l.b16 %v245
    %v285 = vunpack.c.l.b16 %v246
    %v286 = vunpack.c.l.b16 %v247
    %v287 = vpack.c.b16 %v272, %v271
    %v288 = vpack.c.b16 %v274, %v273
    %v289 = vpack.c.b16 %v276, %v275
    %v290 = vpack.c.b16 %v278, %v277
    %v291 = vpack.c.b16 %v280, %v279
    %v292 = vpack.c.b16 %v282, %v281
    %v293 = vpack.c.b16 %v284, %v283
    %v294 = vpack.c.b16 %v286, %v285
    %303 = vmatprep.subr.bf16.mxu0 0
    %304 = vmatpush1.bf16.msra.mxu0 %v287
    %305 = vmatprep.subr.bf16.mxu0 0
    %306 = vmatpush1.bf16.msra.mxu0 %v288
    %307 = vmatprep.subr.bf16.mxu0 0
    %308 = vmatpush1.bf16.msra.mxu0 %v289
    %309 = vmatprep.subr.bf16.mxu0 0
    %310 = vmatpush1.bf16.msra.mxu0 %v290
    %311 = vmatprep.subr.bf16.mxu0 0
    %312 = vmatpush1.bf16.msra.mxu0 %v291
    %313 = vmatprep.subr.bf16.mxu0 0
    %314 = vmatpush1.bf16.msra.mxu0 %v292
    %315 = vmatprep.subr.bf16.mxu0 0
    %316 = vmatpush1.bf16.msra.mxu0 %v293
    %317 = vmatprep.subr.bf16.mxu0 0
    %318 = vmatpush1.bf16.msra.mxu0 %v294
    %319 = vmatprep.subr.bf16.mxu0 0
    %320 = vmatpush1.bf16.msra.mxu0 0
    %321 = vmatprep.subr.bf16.mxu0 0
    %322 = vmatpush1.bf16.msra.mxu0 0
    %323 = vmatprep.subr.bf16.mxu0 0
    %324 = vmatpush1.bf16.msra.mxu0 0
    %325 = vmatprep.subr.bf16.mxu0 0
    %326 = vmatpush1.bf16.msra.mxu0 0
    %327 = vmatprep.subr.bf16.mxu0 0
    %328 = vmatpush1.bf16.msra.mxu0 0
    %329 = vmatprep.subr.bf16.mxu0 0
    %330 = vmatpush1.bf16.msra.mxu0 0
    %331 = vmatprep.subr.bf16.mxu0 0
    %332 = vmatpush1.bf16.msra.mxu0 0
    %333 = vmatprep.subr.bf16.mxu0 0
    %334 = vmatpush1.bf16.msra.mxu0 0
    %335 = vmatprep.mubr.bf16.mxu0 0
    %336 = vmatmul.mubr.bf16.gmra.mrb[0].mxu0 %v231
    %v337 = vpop.f32.mrb[0].mxu0
    %v338 = vadd.f32 %v253, %v337
    %v339 = vpop.f32.mrb[0].mxu0
    %v340 = vpop.f32.mrb[0].mxu0
    %v341 = vadd.f32 %v253, %v340
    %v342 = vpop.f32.mrb[0].mxu0
    %343 = vdwg.mxu0
    %v344 = vld [vmem:[%s7] sm:$0x1]
    %v345 = vld [vmem:[%s8] sm:$0x1]
    %346 = vadd.xlane.f32.xlu0 %v338
    %v347 = vpop.xlane.xlu0 %346
    %348 = vadd.xlane.f32.xlu0 %v341
    %v349 = vpop.xlane.xlu0 %348
    %v350 = vmul.f32 %v347, %v184
    %v351 = vmul.f32 %v349, %v184
    %v352 = vsub.f32 %v338, %v350
    %v353 = vsub.f32 %v341, %v351
    %v354 = vmul.f32 %v352, %v177
    %v355 = vmul.f32 %v353, %v177
    %v356 = vmul.f32 %v354, %v354
    %v357 = vmul.f32 %v355, %v355
    %358 = vadd.xlane.f32.xlu0 %v356
    %v359 = vpop.xlane.xlu0 %358
    %360 = vadd.xlane.f32.xlu0 %v357
    %v361 = vpop.xlane.xlu0 %360
    %v362 = vmul.f32 %v359, %v184
    %v363 = vmul.f32 %v361, %v184
    %v364 = vadd.f32 %v362, 1e-05
    %v365 = vadd.f32 %v363, 1e-05
    %v366 = vrsqrt.pop %v364
    %v367 = vrsqrt.pop %v365
    %v368 = vmul.f32 %v354, %v366
    %v369 = vmul.f32 %v355, %v367
    %v371 = vlaneseq
    %v372 = vshrl.u32 %v371, 7
    %v373 = vsub.s32 0, %v372
    %v374 = vrot.slane %v344, %v373
    %v376 = vmul.f32 %v368, %v374
    %v377 = vmul.f32 %v369, %v374
    %v379 = vlaneseq
    %v380 = vshrl.u32 %v379, 7
    %v381 = vsub.s32 0, %v380
    %v382 = vrot.slane %v345, %v381
    %v384 = vadd.f32 %v376, %v382
    %v385 = vadd.f32 %v377, %v382
    %v386 = vadd.f32 %v384, %v167
    %v387 = vadd.f32 %v385, %v171
    %v388 = vmul.f32 %v386, 0.5
    %v389 = vmul.f32 %v387, 0.5
    %v390 = vtanh.pop %v388
    %v391 = vtanh.pop %v389
    %v392 = vmul.f32 %v390, 0.5
    %v393 = vmul.f32 %v391, 0.5
    %v394 = vadd.f32 %v392, 0.5
    %v395 = vadd.f32 %v393, 0.5
    %v396 = vmul.f32 %v386, %v394
    %v397 = vmul.f32 %v387, %v395
    %398 = vst [vmem:[#allocation10] sm:$0xff] %v396
    %399 = vst [vmem:[#allocation10 + $0x8] sm:$0xff] %v397
    // Predicated region
    $region54: #{residual_block.1} parent=1 // pred_check
      _
    $region55: #{residual_block.1} parent=1 // pred_check_branch
      %401 = sbr.rel (0) target = $region57
    $region56: #{residual_block.1} parent=1 // pred_region
      %s403 = ssub.s32 256, 256
      %404 = vsyncadd [#allocation4], %s403
      %s405 = sshll.u32 [#allocation10], 4
      %s406 = int_to_ptr.vmem [resolvable:$true] %s405
      %411 = dma.vmem_to_hbm [thread:$0]  %s406, 256, %s9, [#allocation4], 128, 128, 8
    $region57: #{residual_block.1} parent=1 // pred_fallthru
      _
    // Predicated region
    $region58: #{residual_block.1} parent=1 // pred_check
      _
    $region59: #{residual_block.1} parent=1 // pred_check_branch
      %413 = sbr.rel (0) target = $region61
    $region60: #{residual_block.1} parent=1 // pred_region
      %414 = dma.done [#allocation4], 256
    $region61: #{residual_block.1} parent=1 // pred_fallthru
      _
    %415 = vsyncpa [#allocation3], 1
    %416 = vsyncpa [#allocation6], 1
    %417 = vsyncpa [#allocation9], 1
    %418 = vsyncpa [#allocation4], 1

</llo_original>
